<compile_context>
chip_gen: v6e
topology: v6e:2x2x1
jax: 0.10.0
libtpu: 0.0.40
codegen_flags: <defaults>
</compile_context>

<pallas_src>
import math
import functools

import jax
import jax.numpy as jnp
from jax import lax
from jax.experimental import pallas as pl
from jax.experimental.pallas import tpu as pltpu

# ----------------------------- config -----------------------------------
N_EMBD = 32
N_HEAD = 4
N_INNER = 128           # 4 * n_embd (typical GPT n_inner)
N_CTX = 8               # seq length used in this synthetic example
LN_EPS = 1e-5
_SQRT_2_OVER_PI = 0.7978845608028654


def _layernorm(x, gamma, beta):
    # x: (R, C), gamma/beta: (1, C). Matches torch.nn.LayerNorm semantics.
    mean = jnp.mean(x, axis=-1, keepdims=True)
    var = jnp.mean(jnp.square(x - mean), axis=-1, keepdims=True)
    return (x - mean) * lax.rsqrt(var + LN_EPS) * gamma + beta


def _gelu(x, exact):
    if exact:
        # PyTorch nn.GELU default (exact erf) -- long VALU polynomial.
        return 0.5 * x * (1.0 + lax.erf(x / jnp.sqrt(2.0).astype(x.dtype)))
    # tanh approximation: tanh executes on the EUP slot, essentially free here.
    return 0.5 * x * (1.0 + jnp.tanh(_SQRT_2_OVER_PI * (x + 0.044715 * x * x * x)))


# ------------------------------ kernel -----------------------------------
def block_kernel(x_ref, bias_ref, wslab_ref, pslab_ref, out_ref,
                 *, n_head, n_embd, n_inner, exact_gelu):
    C = n_embd
    hd = C // n_head
    x = x_ref[...].astype(jnp.float32)            # (R, C) token rows of this block

    # --- unpack the single f32 bias/LayerNorm slab (one DMA, 8 rows) ---
    ln1g = pslab_ref[0:1, 0:C]
    ln1b = pslab_ref[1:2, 0:C]
    bp   = pslab_ref[2:3, 0:C]
    ln2g = pslab_ref[3:4, 0:C]
    ln2b = pslab_ref[4:5, 0:C]
    b2   = pslab_ref[5:6, 0:C]
    bqkv = pslab_ref[6:7, 0:3 * C]                # q-part already scaled by 1/sqrt(hd)
    b1   = pslab_ref[7:8, 0:n_inner]

    # --- unpack the single bf16 weight slab (one DMA, all 4 weight matrices) ---
    wqkv = wslab_ref[0:C, 0:3 * C]                # (C, 3C), scale folded into q cols
    wp   = wslab_ref[C:2 * C, 0:C]                # (C, C)
    w1   = wslab_ref[2 * C:3 * C, 0:n_inner]      # (C, n_inner)
    w2   = wslab_ref[3 * C:3 * C + n_inner, 0:C]  # (n_inner, C)

    att_bias = bias_ref[...]                      # (R, R) f32, precomputed in wrapper

    # ---- ln1 + fused q/k/v projection (bf16 operands, f32 accumulation) ----
    xn = _layernorm(x, ln1g, ln1b)
    qkv = jnp.dot(xn.astype(jnp.bfloat16), wqkv,
                  preferred_element_type=jnp.float32) + bqkv
    q = qkv[:, 0:C].astype(jnp.bfloat16)          # already scaled by 1/sqrt(hd)
    k = qkv[:, C:2 * C].astype(jnp.bfloat16)
    v = qkv[:, 2 * C:3 * C].astype(jnp.bfloat16)

    # ---- per-head attention (n_head tiny & static -> unrolled) ----
    head_outs = []
    for h in range(n_head):
        qh = q[:, h * hd:(h + 1) * hd]
        kh = k[:, h * hd:(h + 1) * hd]
        vh = v[:, h * hd:(h + 1) * hd]
        s = lax.dot_general(qh, kh, (((1,), (1,)), ((), ())),
                            preferred_element_type=jnp.float32) + att_bias  # (R, R)
        m = jnp.max(s, axis=-1, keepdims=True)
        e = jnp.exp(s - m)                                              # EUP
        p = e * pl.reciprocal(jnp.sum(e, axis=-1, keepdims=True), approx=True)
        head_outs.append(jnp.dot(p.astype(jnp.bfloat16), vh,
                                 preferred_element_type=jnp.float32))
    y = jnp.concatenate(head_outs, axis=-1).astype(jnp.bfloat16)        # (R, C)

    # ---- output projection + residual ----
    x1 = x + jnp.dot(y, wp, preferred_element_type=jnp.float32) + bp

    # ---- ln2 + MLP + residual ----
    xn2 = _layernorm(x1, ln2g, ln2b)
    h1 = jnp.dot(xn2.astype(jnp.bfloat16), w1,
                 preferred_element_type=jnp.float32) + b1
    h1 = _gelu(h1, exact_gelu)
    out = x1 + jnp.dot(h1.astype(jnp.bfloat16), w2,
                       preferred_element_type=jnp.float32) + b2
    out_ref[...] = out.astype(out_ref.dtype)


# ------------------------------ wrapper -----------------------------------
def make_params(key, n_embd=N_EMBD, n_inner=N_INNER):
    ks = jax.random.split(key, 8)
    init = lambda k, shape: (0.02 * jax.random.normal(k, shape)).astype(jnp.float32)
    return dict(
        ln1_g=jnp.ones((1, n_embd), jnp.float32),
        ln1_b=jnp.zeros((1, n_embd), jnp.float32),
        wq=init(ks[0], (n_embd, n_embd)), bq=jnp.zeros((1, n_embd), jnp.float32),
        wk=init(ks[1], (n_embd, n_embd)), bk=jnp.zeros((1, n_embd), jnp.float32),
        wv=init(ks[2], (n_embd, n_embd)), bv=jnp.zeros((1, n_embd), jnp.float32),
        wp=init(ks[3], (n_embd, n_embd)), bp=jnp.zeros((1, n_embd), jnp.float32),
        ln2_g=jnp.ones((1, n_embd), jnp.float32),
        ln2_b=jnp.zeros((1, n_embd), jnp.float32),
        w1=init(ks[4], (n_embd, n_inner)), b1=jnp.zeros((1, n_inner), jnp.float32),
        w2=init(ks[5], (n_inner, n_embd)), b2=jnp.zeros((1, n_embd), jnp.float32),
    )


def _pack_param_slabs(params, n_head):
    C = params["wq"].shape[0]
    n_inner = params["w1"].shape[1]
    hd = C // n_head
    scale = 1.0 / math.sqrt(hd)
    cols = max(128, 3 * C, n_inner)

    # One bf16 weight slab: wqkv / wp / w1 / w2.  1/sqrt(hd) folded into wq.
    wslab = jnp.zeros((3 * C + n_inner, cols), jnp.float32)
    wslab = wslab.at[0:C, 0:C].set(params["wq"] * scale)
    wslab = wslab.at[0:C, C:2 * C].set(params["wk"])
    wslab = wslab.at[0:C, 2 * C:3 * C].set(params["wv"])
    wslab = wslab.at[C:2 * C, 0:C].set(params["wp"])
    wslab = wslab.at[2 * C:3 * C, 0:n_inner].set(params["w1"])
    wslab = wslab.at[3 * C:3 * C + n_inner, 0:C].set(params["w2"])
    wslab = wslab.astype(jnp.bfloat16)

    # One f32 (8, cols) slab for every small vector parameter.
    pslab = jnp.zeros((8, cols), jnp.float32)
    pslab = pslab.at[0, 0:C].set(params["ln1_g"][0])
    pslab = pslab.at[1, 0:C].set(params["ln1_b"][0])
    pslab = pslab.at[2, 0:C].set(params["bp"][0])
    pslab = pslab.at[3, 0:C].set(params["ln2_g"][0])
    pslab = pslab.at[4, 0:C].set(params["ln2_b"][0])
    pslab = pslab.at[5, 0:C].set(params["b2"][0])
    pslab = pslab.at[6, 0:C].set(params["bq"][0] * scale)
    pslab = pslab.at[6, C:2 * C].set(params["bk"][0])
    pslab = pslab.at[6, 2 * C:3 * C].set(params["bv"][0])
    pslab = pslab.at[7, 0:n_inner].set(params["b1"][0])
    return wslab, pslab


def _build_att_bias(mask, block_b):
    # Additive attention bias per batch-block, precomputed on the wrapper side:
    #   cross-batch or causal-disallowed pairs -> -1e9  (softmax prob exactly 0)
    #   padded keys                            -> -1e4  (matches reference -10000)
    B, T = mask.shape
    nb = B // block_b
    R = block_b * T
    row = jnp.arange(R)
    col = jnp.arange(R)
    same_b = (row[:, None] // T) == (col[None, :] // T)
    causal = (row[:, None] % T) >= (col[None, :] % T)
    base = jnp.where(same_b & causal, 0.0, -1e9).astype(jnp.float32)       # (R, R)
    pad_add = (1.0 - mask.reshape(nb, R).astype(jnp.float32)) * -10000.0   # (nb, R)
    bias = base[None, :, :] + pad_add[:, None, :]                          # (nb, R, R)
    return bias.reshape(nb * R, R)


def _pick_block_b(B):
    # v7x has 2 TensorCores per chip: shard independent batch blocks across them.
    # v5e / v6e have a single TC, where extra grid steps only add ~0.35 us each.
    try:
        kind = jax.devices()[0].device_kind.lower()
    except Exception:
        kind = ""
    if "v7" in kind and B % 2 == 0:
        return B // 2
    return B


def block_forward(x, mask, params, *, n_head=N_HEAD, block_b=None, exact_gelu=False):
    B, T, C = x.shape
    n_inner = params["w1"].shape[1]
    if block_b is None:
        block_b = _pick_block_b(B)
    assert B % block_b == 0
    nb = B // block_b
    R = block_b * T                     # token rows per grid step

    wslab, pslab = _pack_param_slabs(params, n_head)
    att_bias = _build_att_bias(mask, block_b)       # (nb*R, R) f32
    x2d = x.reshape(B * T, C)                        # flat tokens, no in-kernel reshape

    wrows, wcols = wslab.shape
    prows, pcols = pslab.shape

    kernel = functools.partial(block_kernel, n_head=n_head, n_embd=C,
                               n_inner=n_inner, exact_gelu=exact_gelu)
    out2d = pl.pallas_call(
        kernel,
        out_shape=jax.ShapeDtypeStruct((B * T, C), jnp.float32),
        grid_spec=pltpu.PrefetchScalarGridSpec(
            num_scalar_prefetch=0,
            grid=(nb,),
            in_specs=[
                pl.BlockSpec((R, C), lambda i: (i, 0)),          # token rows
                pl.BlockSpec((R, R), lambda i: (i, 0)),          # attention bias block
                pl.BlockSpec((wrows, wcols), lambda i: (0, 0)),  # packed weights (bf16)
                pl.BlockSpec((prows, pcols), lambda i: (0, 0)),  # packed biases (f32)
            ],
            out_specs=pl.BlockSpec((R, C), lambda i: (i, 0)),
        ),
        compiler_params=pltpu.CompilerParams(
            dimension_semantics=("parallel",)),                  # batch blocks independent
    )(x2d, att_bias, wslab, pslab)
    return out2d.reshape(B, T, C)


# ---------------------- pure-JAX reference (for verification) -------------
def block_reference(x, mask, params, *, n_head=N_HEAD):
    B, T, C = x.shape
    hd = C // n_head

    def ln(z, g, b):
        m = jnp.mean(z, -1, keepdims=True)
        v = jnp.mean(jnp.square(z - m), -1, keepdims=True)
        return (z - m) / jnp.sqrt(v + LN_EPS) * g + b

    xn = ln(x, params["ln1_g"], params["ln1_b"])
    q = xn @ params["wq"] + params["bq"]
    k = xn @ params["wk"] + params["bk"]
    v = xn @ params["wv"] + params["bv"]
    q = q.reshape(B, T, n_head, hd).transpose(0, 2, 1, 3)
    k = k.reshape(B, T, n_head, hd).transpose(0, 2, 1, 3)
    v = v.reshape(B, T, n_head, hd).transpose(0, 2, 1, 3)
    att = jnp.einsum("bhqd,bhkd->bhqk", q, k) / math.sqrt(hd)
    causal = jnp.tril(jnp.ones((T, T), bool))
    att = jnp.where(causal[None, None], att, -10000.0)
    att = att + (1.0 - mask)[:, None, None, :] * -10000.0
    att = jax.nn.softmax(att, axis=-1)
    y = jnp.einsum("bhqk,bhkd->bhqd", att, v).transpose(0, 2, 1, 3).reshape(B, T, C)
    x1 = x + (y @ params["wp"] + params["bp"])
    xn2 = ln(x1, params["ln2_g"], params["ln2_b"])
    h = xn2 @ params["w1"] + params["b1"]
    h = 0.5 * h * (1.0 + lax.erf(h / jnp.sqrt(2.0)))   # exact GELU (nn.GELU default)
    return x1 + (h @ params["w2"] + params["b2"])


if __name__ == "__main__":
    key = jax.random.PRNGKey(0)
    kx, kp = jax.random.split(key)

    B, T, C = 2, N_CTX, N_EMBD
    x = jax.random.normal(kx, (B, T, C), jnp.float32)
    # padding mask: batch 0 fully valid, batch 1 has last two positions masked
    mask = jnp.ones((B, T), jnp.float32)
    mask = mask.at[1, -2:].set(0.0)

    params = make_params(kp)

    out = block_forward(x, mask, params)
    out = jax.block_until_ready(out)

    ref = block_reference(x, mask, params)
    assert out.shape == (B, T, C)
    # bf16 MXU operands + tanh-GELU + approx reciprocal vs the exact f32 reference:
    # tolerance loosened per review (f32 residual still dominates the output).
    assert jnp.allclose(out, ref, atol=2e-2, rtol=2e-2), "mismatch vs reference"

    print("KERNEL_OK")
</pallas_src>

<mosaic_0001>
module attributes {stable_mosaic.version = 11 : i64} {
  func.func @block_kernel(%arg0: i32, %arg1: memref<16x32xf32, #tpu.memory_space<vmem>>, %arg2: memref<16x16xf32, #tpu.memory_space<vmem>>, %arg3: memref<224x128xbf16, #tpu.memory_space<vmem>>, %arg4: memref<8x128xf32, #tpu.memory_space<vmem>>, %arg5: memref<16x32xf32, #tpu.memory_space<vmem>>) attributes {dimension_semantics = [#tpu.dimension_semantics<parallel>], iteration_bounds = array<i64: 1>, scalar_prefetch = 0 : i64, scratch_operands = 0 : i64, tpu.core_type = #tpu.core_type<tc>, window_params = [{transform_indices = @transform_0, window_bounds = array<i64: 16, 32>}, {transform_indices = @transform_1, window_bounds = array<i64: 16, 16>}, {pipeline_mode = #tpu.pipeline_mode<synchronous>, transform_indices = @transform_2, window_bounds = array<i64: 224, 128>}, {pipeline_mode = #tpu.pipeline_mode<synchronous>, transform_indices = @transform_3, window_bounds = array<i64: 8, 128>}, {transform_indices = @transform_4, window_bounds = array<i64: 16, 32>}]} {
    %c0 = arith.constant 0 : index
    %c0_0 = arith.constant 0 : index
    %0 = vector.load %arg1[%c0, %c0_0] : memref<16x32xf32, #tpu.memory_space<vmem>>, vector<16x32xf32>
    %c0_1 = arith.constant 0 : index
    %c0_2 = arith.constant 0 : index
    %1 = vector.load %arg4[%c0_1, %c0_2] : memref<8x128xf32, #tpu.memory_space<vmem>>, vector<1x32xf32>
    %c1 = arith.constant 1 : index
    %c0_3 = arith.constant 0 : index
    %2 = vector.load %arg4[%c1, %c0_3] : memref<8x128xf32, #tpu.memory_space<vmem>>, vector<1x32xf32>
    %c2 = arith.constant 2 : index
    %c0_4 = arith.constant 0 : index
    %3 = vector.load %arg4[%c2, %c0_4] : memref<8x128xf32, #tpu.memory_space<vmem>>, vector<1x32xf32>
    %c3 = arith.constant 3 : index
    %c0_5 = arith.constant 0 : index
    %4 = vector.load %arg4[%c3, %c0_5] : memref<8x128xf32, #tpu.memory_space<vmem>>, vector<1x32xf32>
    %c4 = arith.constant 4 : index
    %c0_6 = arith.constant 0 : index
    %5 = vector.load %arg4[%c4, %c0_6] : memref<8x128xf32, #tpu.memory_space<vmem>>, vector<1x32xf32>
    %c5 = arith.constant 5 : index
    %c0_7 = arith.constant 0 : index
    %6 = vector.load %arg4[%c5, %c0_7] : memref<8x128xf32, #tpu.memory_space<vmem>>, vector<1x32xf32>
    %c6 = arith.constant 6 : index
    %c0_8 = arith.constant 0 : index
    %7 = vector.load %arg4[%c6, %c0_8] : memref<8x128xf32, #tpu.memory_space<vmem>>, vector<1x96xf32>
    %c7 = arith.constant 7 : index
    %c0_9 = arith.constant 0 : index
    %8 = vector.load %arg4[%c7, %c0_9] : memref<8x128xf32, #tpu.memory_space<vmem>>, vector<1x128xf32>
    %c0_10 = arith.constant 0 : index
    %c0_11 = arith.constant 0 : index
    %9 = vector.load %arg3[%c0_10, %c0_11] : memref<224x128xbf16, #tpu.memory_space<vmem>>, vector<32x96xbf16>
    %c32 = arith.constant 32 : index
    %c0_12 = arith.constant 0 : index
    %10 = vector.load %arg3[%c32, %c0_12] : memref<224x128xbf16, #tpu.memory_space<vmem>>, vector<32x32xbf16>
    %c64 = arith.constant 64 : index
    %c0_13 = arith.constant 0 : index
    %11 = vector.load %arg3[%c64, %c0_13] : memref<224x128xbf16, #tpu.memory_space<vmem>>, vector<32x128xbf16>
    %c96 = arith.constant 96 : index
    %c0_14 = arith.constant 0 : index
    %12 = vector.load %arg3[%c96, %c0_14] : memref<224x128xbf16, #tpu.memory_space<vmem>>, vector<128x32xbf16>
    %c0_15 = arith.constant 0 : index
    %c0_16 = arith.constant 0 : index
    %13 = vector.load %arg2[%c0_15, %c0_16] : memref<16x16xf32, #tpu.memory_space<vmem>>, vector<16x16xf32>
    %cst = arith.constant dense<0.000000e+00> : vector<16xf32>
    %14 = vector.multi_reduction <add>, %0, %cst [1] : vector<16x32xf32> to vector<16xf32>
    %15 = vector.shape_cast %14 : vector<16xf32> to vector<16x1xf32>
    %cst_17 = arith.constant 3.200000e+01 : f32
    %16 = vector.broadcast %cst_17 : f32 to vector<16x1xf32>
    %17 = arith.divf %15, %16 : vector<16x1xf32>
    %18 = vector.broadcast %17 : vector<16x1xf32> to vector<16x32xf32>
    %19 = arith.subf %0, %18 : vector<16x32xf32>
    %20 = arith.mulf %19, %19 : vector<16x32xf32>
    %cst_18 = arith.constant dense<0.000000e+00> : vector<16xf32>
    %21 = vector.multi_reduction <add>, %20, %cst_18 [1] : vector<16x32xf32> to vector<16xf32>
    %22 = vector.shape_cast %21 : vector<16xf32> to vector<16x1xf32>
    %cst_19 = arith.constant 3.200000e+01 : f32
    %23 = vector.broadcast %cst_19 : f32 to vector<16x1xf32>
    %24 = arith.divf %22, %23 : vector<16x1xf32>
    %25 = vector.broadcast %17 : vector<16x1xf32> to vector<16x32xf32>
    %26 = arith.subf %0, %25 : vector<16x32xf32>
    %cst_20 = arith.constant 9.99999974E-6 : f32
    %27 = vector.broadcast %cst_20 : f32 to vector<16x1xf32>
    %28 = arith.addf %24, %27 : vector<16x1xf32>
    %29 = math.rsqrt %28 : vector<16x1xf32>
    %30 = vector.broadcast %29 : vector<16x1xf32> to vector<16x32xf32>
    %31 = arith.mulf %26, %30 : vector<16x32xf32>
    %32 = vector.broadcast %1 : vector<1x32xf32> to vector<16x32xf32>
    %33 = arith.mulf %31, %32 : vector<16x32xf32>
    %34 = vector.broadcast %2 : vector<1x32xf32> to vector<16x32xf32>
    %35 = arith.addf %33, %34 : vector<16x32xf32>
    %36 = arith.truncf %35 : vector<16x32xf32> to vector<16x32xbf16>
    %cst_21 = arith.constant dense<0.000000e+00> : vector<16x96xf32>
    %37 = tpu.matmul %36, %9, %cst_21 {dimension_numbers = #tpu.dot_dimension_numbers<[1], [0], [0], [1], [0, 0, 1, 1], [], []>} : vector<16x32xbf16>, vector<32x96xbf16>, vector<16x96xf32> -> vector<16x96xf32>
    %38 = vector.broadcast %7 : vector<1x96xf32> to vector<16x96xf32>
    %39 = arith.addf %37, %38 : vector<16x96xf32>
    %40 = vector.extract_strided_slice %39 {offsets = [0, 0], sizes = [16, 32], strides = [1, 1]} : vector<16x96xf32> to vector<16x32xf32>
    %41 = arith.truncf %40 : vector<16x32xf32> to vector<16x32xbf16>
    %42 = vector.extract_strided_slice %39 {offsets = [0, 32], sizes = [16, 32], strides = [1, 1]} : vector<16x96xf32> to vector<16x32xf32>
    %43 = arith.truncf %42 : vector<16x32xf32> to vector<16x32xbf16>
    %44 = vector.extract_strided_slice %39 {offsets = [0, 64], sizes = [16, 32], strides = [1, 1]} : vector<16x96xf32> to vector<16x32xf32>
    %45 = arith.truncf %44 : vector<16x32xf32> to vector<16x32xbf16>
    %46 = vector.extract_strided_slice %41 {offsets = [0, 0], sizes = [16, 8], strides = [1, 1]} : vector<16x32xbf16> to vector<16x8xbf16>
    %47 = vector.extract_strided_slice %43 {offsets = [0, 0], sizes = [16, 8], strides = [1, 1]} : vector<16x32xbf16> to vector<16x8xbf16>
    %48 = vector.extract_strided_slice %45 {offsets = [0, 0], sizes = [16, 8], strides = [1, 1]} : vector<16x32xbf16> to vector<16x8xbf16>
    %cst_22 = arith.constant dense<0.000000e+00> : vector<16x16xf32>
    %49 = tpu.matmul %46, %47, %cst_22 {dimension_numbers = #tpu.dot_dimension_numbers<[1], [1], [0], [0], [0, 0, 1, 0], [], []>} : vector<16x8xbf16>, vector<16x8xbf16>, vector<16x16xf32> -> vector<16x16xf32>
    %50 = arith.addf %49, %13 : vector<16x16xf32>
    %cst_23 = arith.constant dense<0xFF800000> : vector<16xf32>
    %51 = vector.multi_reduction <maximumf>, %50, %cst_23 [1] : vector<16x16xf32> to vector<16xf32>
    %52 = vector.shape_cast %51 : vector<16xf32> to vector<16x1xf32>
    %53 = vector.broadcast %52 : vector<16x1xf32> to vector<16x16xf32>
    %54 = arith.subf %50, %53 : vector<16x16xf32>
    %55 = math.exp %54 : vector<16x16xf32>
    %cst_24 = arith.constant dense<0.000000e+00> : vector<16xf32>
    %56 = vector.multi_reduction <add>, %55, %cst_24 [1] : vector<16x16xf32> to vector<16xf32>
    %57 = vector.shape_cast %56 : vector<16xf32> to vector<16x1xf32>
    %58 = tpu.reciprocal %57 {approx = true} : vector<16x1xf32> -> vector<16x1xf32>
    %59 = vector.broadcast %58 : vector<16x1xf32> to vector<16x16xf32>
    %60 = arith.mulf %55, %59 : vector<16x16xf32>
    %61 = arith.truncf %60 : vector<16x16xf32> to vector<16x16xbf16>
    %cst_25 = arith.constant dense<0.000000e+00> : vector<16x8xf32>
    %62 = tpu.matmul %61, %48, %cst_25 {dimension_numbers = #tpu.dot_dimension_numbers<[1], [0], [0], [1], [0, 0, 1, 1], [], []>} : vector<16x16xbf16>, vector<16x8xbf16>, vector<16x8xf32> -> vector<16x8xf32>
    %63 = vector.extract_strided_slice %41 {offsets = [0, 8], sizes = [16, 8], strides = [1, 1]} : vector<16x32xbf16> to vector<16x8xbf16>
    %64 = vector.extract_strided_slice %43 {offsets = [0, 8], sizes = [16, 8], strides = [1, 1]} : vector<16x32xbf16> to vector<16x8xbf16>
    %65 = vector.extract_strided_slice %45 {offsets = [0, 8], sizes = [16, 8], strides = [1, 1]} : vector<16x32xbf16> to vector<16x8xbf16>
    %cst_26 = arith.constant dense<0.000000e+00> : vector<16x16xf32>
    %66 = tpu.matmul %63, %64, %cst_26 {dimension_numbers = #tpu.dot_dimension_numbers<[1], [1], [0], [0], [0, 0, 1, 0], [], []>} : vector<16x8xbf16>, vector<16x8xbf16>, vector<16x16xf32> -> vector<16x16xf32>
    %67 = arith.addf %66, %13 : vector<16x16xf32>
    %cst_27 = arith.constant dense<0xFF800000> : vector<16xf32>
    %68 = vector.multi_reduction <maximumf>, %67, %cst_27 [1] : vector<16x16xf32> to vector<16xf32>
    %69 = vector.shape_cast %68 : vector<16xf32> to vector<16x1xf32>
    %70 = vector.broadcast %69 : vector<16x1xf32> to vector<16x16xf32>
    %71 = arith.subf %67, %70 : vector<16x16xf32>
    %72 = math.exp %71 : vector<16x16xf32>
    %cst_28 = arith.constant dense<0.000000e+00> : vector<16xf32>
    %73 = vector.multi_reduction <add>, %72, %cst_28 [1] : vector<16x16xf32> to vector<16xf32>
    %74 = vector.shape_cast %73 : vector<16xf32> to vector<16x1xf32>
    %75 = tpu.reciprocal %74 {approx = true} : vector<16x1xf32> -> vector<16x1xf32>
    %76 = vector.broadcast %75 : vector<16x1xf32> to vector<16x16xf32>
    %77 = arith.mulf %72, %76 : vector<16x16xf32>
    %78 = arith.truncf %77 : vector<16x16xf32> to vector<16x16xbf16>
    %cst_29 = arith.constant dense<0.000000e+00> : vector<16x8xf32>
    %79 = tpu.matmul %78, %65, %cst_29 {dimension_numbers = #tpu.dot_dimension_numbers<[1], [0], [0], [1], [0, 0, 1, 1], [], []>} : vector<16x16xbf16>, vector<16x8xbf16>, vector<16x8xf32> -> vector<16x8xf32>
    %80 = vector.extract_strided_slice %41 {offsets = [0, 16], sizes = [16, 8], strides = [1, 1]} : vector<16x32xbf16> to vector<16x8xbf16>
    %81 = vector.extract_strided_slice %43 {offsets = [0, 16], sizes = [16, 8], strides = [1, 1]} : vector<16x32xbf16> to vector<16x8xbf16>
    %82 = vector.extract_strided_slice %45 {offsets = [0, 16], sizes = [16, 8], strides = [1, 1]} : vector<16x32xbf16> to vector<16x8xbf16>
    %cst_30 = arith.constant dense<0.000000e+00> : vector<16x16xf32>
    %83 = tpu.matmul %80, %81, %cst_30 {dimension_numbers = #tpu.dot_dimension_numbers<[1], [1], [0], [0], [0, 0, 1, 0], [], []>} : vector<16x8xbf16>, vector<16x8xbf16>, vector<16x16xf32> -> vector<16x16xf32>
    %84 = arith.addf %83, %13 : vector<16x16xf32>
    %cst_31 = arith.constant dense<0xFF800000> : vector<16xf32>
    %85 = vector.multi_reduction <maximumf>, %84, %cst_31 [1] : vector<16x16xf32> to vector<16xf32>
    %86 = vector.shape_cast %85 : vector<16xf32> to vector<16x1xf32>
    %87 = vector.broadcast %86 : vector<16x1xf32> to vector<16x16xf32>
    %88 = arith.subf %84, %87 : vector<16x16xf32>
    %89 = math.exp %88 : vector<16x16xf32>
    %cst_32 = arith.constant dense<0.000000e+00> : vector<16xf32>
    %90 = vector.multi_reduction <add>, %89, %cst_32 [1] : vector<16x16xf32> to vector<16xf32>
    %91 = vector.shape_cast %90 : vector<16xf32> to vector<16x1xf32>
    %92 = tpu.reciprocal %91 {approx = true} : vector<16x1xf32> -> vector<16x1xf32>
    %93 = vector.broadcast %92 : vector<16x1xf32> to vector<16x16xf32>
    %94 = arith.mulf %89, %93 : vector<16x16xf32>
    %95 = arith.truncf %94 : vector<16x16xf32> to vector<16x16xbf16>
    %cst_33 = arith.constant dense<0.000000e+00> : vector<16x8xf32>
    %96 = tpu.matmul %95, %82, %cst_33 {dimension_numbers = #tpu.dot_dimension_numbers<[1], [0], [0], [1], [0, 0, 1, 1], [], []>} : vector<16x16xbf16>, vector<16x8xbf16>, vector<16x8xf32> -> vector<16x8xf32>
    %97 = vector.extract_strided_slice %41 {offsets = [0, 24], sizes = [16, 8], strides = [1, 1]} : vector<16x32xbf16> to vector<16x8xbf16>
    %98 = vector.extract_strided_slice %43 {offsets = [0, 24], sizes = [16, 8], strides = [1, 1]} : vector<16x32xbf16> to vector<16x8xbf16>
    %99 = vector.extract_strided_slice %45 {offsets = [0, 24], sizes = [16, 8], strides = [1, 1]} : vector<16x32xbf16> to vector<16x8xbf16>
    %cst_34 = arith.constant dense<0.000000e+00> : vector<16x16xf32>
    %100 = tpu.matmul %97, %98, %cst_34 {dimension_numbers = #tpu.dot_dimension_numbers<[1], [1], [0], [0], [0, 0, 1, 0], [], []>} : vector<16x8xbf16>, vector<16x8xbf16>, vector<16x16xf32> -> vector<16x16xf32>
    %101 = arith.addf %100, %13 : vector<16x16xf32>
    %cst_35 = arith.constant dense<0xFF800000> : vector<16xf32>
    %102 = vector.multi_reduction <maximumf>, %101, %cst_35 [1] : vector<16x16xf32> to vector<16xf32>
    %103 = vector.shape_cast %102 : vector<16xf32> to vector<16x1xf32>
    %104 = vector.broadcast %103 : vector<16x1xf32> to vector<16x16xf32>
    %105 = arith.subf %101, %104 : vector<16x16xf32>
    %106 = math.exp %105 : vector<16x16xf32>
    %cst_36 = arith.constant dense<0.000000e+00> : vector<16xf32>
    %107 = vector.multi_reduction <add>, %106, %cst_36 [1] : vector<16x16xf32> to vector<16xf32>
    %108 = vector.shape_cast %107 : vector<16xf32> to vector<16x1xf32>
    %109 = tpu.reciprocal %108 {approx = true} : vector<16x1xf32> -> vector<16x1xf32>
    %110 = vector.broadcast %109 : vector<16x1xf32> to vector<16x16xf32>
    %111 = arith.mulf %106, %110 : vector<16x16xf32>
    %112 = arith.truncf %111 : vector<16x16xf32> to vector<16x16xbf16>
    %cst_37 = arith.constant dense<0.000000e+00> : vector<16x8xf32>
    %113 = tpu.matmul %112, %99, %cst_37 {dimension_numbers = #tpu.dot_dimension_numbers<[1], [0], [0], [1], [0, 0, 1, 1], [], []>} : vector<16x16xbf16>, vector<16x8xbf16>, vector<16x8xf32> -> vector<16x8xf32>
    %114 = tpu.concatenate %62, %79, %96, %113 in 1 : vector<16x8xf32>, vector<16x8xf32>, vector<16x8xf32>, vector<16x8xf32> -> vector<16x32xf32>
    %115 = arith.truncf %114 : vector<16x32xf32> to vector<16x32xbf16>
    %cst_38 = arith.constant dense<0.000000e+00> : vector<16x32xf32>
    %116 = tpu.matmul %115, %10, %cst_38 {dimension_numbers = #tpu.dot_dimension_numbers<[1], [0], [0], [1], [0, 0, 1, 1], [], []>} : vector<16x32xbf16>, vector<32x32xbf16>, vector<16x32xf32> -> vector<16x32xf32>
    %117 = arith.addf %0, %116 : vector<16x32xf32>
    %118 = vector.broadcast %3 : vector<1x32xf32> to vector<16x32xf32>
    %119 = arith.addf %117, %118 : vector<16x32xf32>
    %cst_39 = arith.constant dense<0.000000e+00> : vector<16xf32>
    %120 = vector.multi_reduction <add>, %119, %cst_39 [1] : vector<16x32xf32> to vector<16xf32>
    %121 = vector.shape_cast %120 : vector<16xf32> to vector<16x1xf32>
    %cst_40 = arith.constant 3.200000e+01 : f32
    %122 = vector.broadcast %cst_40 : f32 to vector<16x1xf32>
    %123 = arith.divf %121, %122 : vector<16x1xf32>
    %124 = vector.broadcast %123 : vector<16x1xf32> to vector<16x32xf32>
    %125 = arith.subf %119, %124 : vector<16x32xf32>
    %126 = arith.mulf %125, %125 : vector<16x32xf32>
    %cst_41 = arith.constant dense<0.000000e+00> : vector<16xf32>
    %127 = vector.multi_reduction <add>, %126, %cst_41 [1] : vector<16x32xf32> to vector<16xf32>
    %128 = vector.shape_cast %127 : vector<16xf32> to vector<16x1xf32>
    %cst_42 = arith.constant 3.200000e+01 : f32
    %129 = vector.broadcast %cst_42 : f32 to vector<16x1xf32>
    %130 = arith.divf %128, %129 : vector<16x1xf32>
    %131 = vector.broadcast %123 : vector<16x1xf32> to vector<16x32xf32>
    %132 = arith.subf %119, %131 : vector<16x32xf32>
    %cst_43 = arith.constant 9.99999974E-6 : f32
    %133 = vector.broadcast %cst_43 : f32 to vector<16x1xf32>
    %134 = arith.addf %130, %133 : vector<16x1xf32>
    %135 = math.rsqrt %134 : vector<16x1xf32>
    %136 = vector.broadcast %135 : vector<16x1xf32> to vector<16x32xf32>
    %137 = arith.mulf %132, %136 : vector<16x32xf32>
    %138 = vector.broadcast %4 : vector<1x32xf32> to vector<16x32xf32>
    %139 = arith.mulf %137, %138 : vector<16x32xf32>
    %140 = vector.broadcast %5 : vector<1x32xf32> to vector<16x32xf32>
    %141 = arith.addf %139, %140 : vector<16x32xf32>
    %142 = arith.truncf %141 : vector<16x32xf32> to vector<16x32xbf16>
    %cst_44 = arith.constant dense<0.000000e+00> : vector<16x128xf32>
    %143 = tpu.matmul %142, %11, %cst_44 {dimension_numbers = #tpu.dot_dimension_numbers<[1], [0], [0], [1], [0, 0, 1, 1], [], []>} : vector<16x32xbf16>, vector<32x128xbf16>, vector<16x128xf32> -> vector<16x128xf32>
    %144 = vector.broadcast %8 : vector<1x128xf32> to vector<16x128xf32>
    %145 = arith.addf %143, %144 : vector<16x128xf32>
    %cst_45 = arith.constant 5.000000e-01 : f32
    %146 = vector.broadcast %cst_45 : f32 to vector<16x128xf32>
    %147 = arith.mulf %146, %145 : vector<16x128xf32>
    %cst_46 = arith.constant 4.471500e-02 : f32
    %148 = vector.broadcast %cst_46 : f32 to vector<16x128xf32>
    %149 = arith.mulf %148, %145 : vector<16x128xf32>
    %150 = arith.mulf %149, %145 : vector<16x128xf32>
    %151 = arith.mulf %150, %145 : vector<16x128xf32>
    %152 = arith.addf %145, %151 : vector<16x128xf32>
    %cst_47 = arith.constant 0.797884583 : f32
    %153 = vector.broadcast %cst_47 : f32 to vector<16x128xf32>
    %154 = arith.mulf %153, %152 : vector<16x128xf32>
    %155 = math.tanh %154 : vector<16x128xf32>
    %cst_48 = arith.constant 1.000000e+00 : f32
    %156 = vector.broadcast %cst_48 : f32 to vector<16x128xf32>
    %157 = arith.addf %156, %155 : vector<16x128xf32>
    %158 = arith.mulf %147, %157 : vector<16x128xf32>
    %159 = arith.truncf %158 : vector<16x128xf32> to vector<16x128xbf16>
    %cst_49 = arith.constant dense<0.000000e+00> : vector<16x32xf32>
    %160 = tpu.matmul %159, %12, %cst_49 {dimension_numbers = #tpu.dot_dimension_numbers<[1], [0], [0], [1], [0, 0, 1, 1], [], []>} : vector<16x128xbf16>, vector<128x32xbf16>, vector<16x32xf32> -> vector<16x32xf32>
    %161 = arith.addf %119, %160 : vector<16x32xf32>
    %162 = vector.broadcast %6 : vector<1x32xf32> to vector<16x32xf32>
    %163 = arith.addf %161, %162 : vector<16x32xf32>
    %c0_50 = arith.constant 0 : index
    %c0_51 = arith.constant 0 : index
    %164 = vector.load %arg5[%c0_50, %c0_51] : memref<16x32xf32, #tpu.memory_space<vmem>>, vector<16x32xf32>
    tpu.vector_store %arg5[%c0_50, %c0_51], %163 {strides = array<i32>} : memref<16x32xf32, #tpu.memory_space<vmem>>, vector<16x32xf32>,
    return
  }
  func.func @transform_0(%arg0: i32) -> (i32, i32) {
    %c0_i32 = arith.constant 0 : i32
    %c0_i32_0 = arith.constant 0 : i32
    return %arg0, %c0_i32 : i32, i32
  }
  func.func @transform_1(%arg0: i32) -> (i32, i32) {
    %c0_i32 = arith.constant 0 : i32
    %c0_i32_0 = arith.constant 0 : i32
    return %arg0, %c0_i32 : i32, i32
  }
  func.func @transform_2(%arg0: i32) -> (i32, i32) {
    %c0_i32 = arith.constant 0 : i32
    %c0_i32_0 = arith.constant 0 : i32
    %c0_i32_1 = arith.constant 0 : i32
    return %c0_i32, %c0_i32_0 : i32, i32
  }
  func.func @transform_3(%arg0: i32) -> (i32, i32) {
    %c0_i32 = arith.constant 0 : i32
    %c0_i32_0 = arith.constant 0 : i32
    %c0_i32_1 = arith.constant 0 : i32
    return %c0_i32, %c0_i32_0 : i32, i32
  }
  func.func @transform_4(%arg0: i32) -> (i32, i32) {
    %c0_i32 = arith.constant 0 : i32
    %c0_i32_0 = arith.constant 0 : i32
    return %arg0, %c0_i32 : i32, i32
  }
}

</mosaic_0001>

<llo_original>
// kernel: tpu_custom_call.1
$region0: #{tpu_custom_call.1}
  #allocation0 [shape = 'u32[]', space=smem, size = 0x4, offset = 0x4, fixed_abs, tag = 'smem constant byte address 0x4 - core index']
  #allocation1 [shape = 'u32[144,128]{1,0:T(1,128)}', space=vmem, size = 0x12000, scoped, tag = 'internal scratch']
  %s0 = inlined_call_operand.hbm [shape: f32[16,32], index: 0, kind: input, shape index: {}]
  %s1 = inlined_call_operand.hbm [shape: f32[16,16], index: 1, kind: input, shape index: {}]
  %s2 = inlined_call_operand.hbm [shape: bf16[224,128], index: 2, kind: input, shape index: {}]
  %s3 = inlined_call_operand.hbm [shape: f32[8,128], index: 3, kind: input, shape index: {}]
  %s4 = inlined_call_operand.hbm [shape: f32[16,32], index: 4, kind: output, shape index: {}]
  %s5 = sld [smem:[#allocation0]]
  $region42: #{tpu_custom_call.1} parent=0
    _
  %s7 = ssub.s32 1, %s5
  %s8 = scalar_select 0, %s7, %s5
  $region1: #{tpu_custom_call.1} parent=0
    #allocation2 [shape = 'u8[8192]{0}', space=vmem, size = 0x2000, scoped, tag = 'input window, operand 0, single buffered']
    #allocation3 [shape = 's32[1]{0}', space=sflag, size = 0x4, scoped, tag = 'scoped memory for tpu_custom_call.1']
    #allocation4 [shape = 's32[1]{0}', space=sflag, size = 0x4, scoped, tag = 'scoped memory for tpu_custom_call.1']
    #allocation5 [shape = 'u8[8192]{0}', space=vmem, size = 0x2000, scoped, tag = 'input window, operand 1, single buffered']
    #allocation6 [shape = 's32[1]{0}', space=sflag, size = 0x4, scoped, tag = 'scoped memory for tpu_custom_call.1']
    #allocation7 [shape = 'u8[57344]{0}', space=vmem, size = 0xe000, scoped, tag = 'input window, operand 2, single buffered']
    #allocation8 [shape = 'u8[4096]{0}', space=vmem, size = 0x1000, scoped, tag = 'input window, operand 3, single buffered']
    #allocation9 [shape = 's32[1]{0}', space=sflag, size = 0x4, scoped, tag = 'scoped memory for tpu_custom_call.1']
    #allocation10 [shape = 'u8[8192]{0}', space=vmem, size = 0x2000, scoped, tag = 'output window, operand 0, single buffered']
    %9 = vsyncpa [#allocation3], 0
    %10 = vsyncpa [#allocation6], 0
    %11 = vsyncpa [#allocation9], 0
    %12 = vsyncpa [#allocation4], 0
    // Predicated region
    $region2: #{tpu_custom_call.1} parent=1 // pred_check
      _
    $region3: #{tpu_custom_call.1} parent=1 // pred_check_branch
      %14 = sbr.rel (0) target = $region5
    $region4: #{tpu_custom_call.1} parent=1 // pred_region
      %s16 = ssub.s32 256, 256
      %17 = vsyncadd [#allocation3], %s16
      %s18 = sshll.u32 [#allocation2], 4
      %s19 = int_to_ptr.vmem [resolvable:$true] %s18
      %24 = dma.hbm_to_vmem [thread:$0]  %s0, 256, %s19, [#allocation3], 128, 128, 8
    $region5: #{tpu_custom_call.1} parent=1 // pred_fallthru
      _
    // Predicated region
    $region6: #{tpu_custom_call.1} parent=1 // pred_check
      _
    $region7: #{tpu_custom_call.1} parent=1 // pred_check_branch
      %26 = sbr.rel (0) target = $region9
    $region8: #{tpu_custom_call.1} parent=1 // pred_region
      %s28 = ssub.s32 256, 256
      %29 = vsyncadd [#allocation6], %s28
      %s30 = sshll.u32 [#allocation5], 4
      %s31 = int_to_ptr.vmem [resolvable:$true] %s30
      %36 = dma.hbm_to_vmem [thread:$0]  %s1, 256, %s31, [#allocation6], 128, 128, 8
    $region9: #{tpu_custom_call.1} parent=1 // pred_fallthru
      _
    // Predicated region
    $region10: #{tpu_custom_call.1} parent=1 // pred_check
      _
    $region11: #{tpu_custom_call.1} parent=1 // pred_check_branch
      %38 = sbr.rel (0) target = $region13
    $region12: #{tpu_custom_call.1} parent=1 // pred_region
      %s40 = ssub.s32 1792, 1792
      %41 = vsyncadd [#allocation6], %s40
      %s42 = sshll.u32 [#allocation7], 4
      %s43 = int_to_ptr.vmem [resolvable:$true] %s42
      %48 = dma.hbm_to_vmem [thread:$0]  %s2, 1792, %s43, [#allocation6], 64, 64, 4
    $region13: #{tpu_custom_call.1} parent=1 // pred_fallthru
      _
    // Predicated region
    $region14: #{tpu_custom_call.1} parent=1 // pred_check
      _
    $region15: #{tpu_custom_call.1} parent=1 // pred_check_branch
      %50 = sbr.rel (0) target = $region17
    $region16: #{tpu_custom_call.1} parent=1 // pred_region
      %s52 = ssub.s32 128, 128
      %53 = vsyncadd [#allocation9], %s52
      %s55 = sshll.u32 [#allocation8], 4
      %s56 = int_to_ptr.vmem [resolvable:$true] %s55
      %58 = dma.hbm_to_vmem [thread:$0]  %s3, 128, %s56, [#allocation9]
    $region17: #{tpu_custom_call.1} parent=1 // pred_fallthru
      _
    // Predicated region
    $region18: #{tpu_custom_call.1} parent=1 // pred_check
      _
    $region19: #{tpu_custom_call.1} parent=1 // pred_check_branch
      %60 = sbr.rel (0) target = $region21
    $region20: #{tpu_custom_call.1} parent=1 // pred_region
      %61 = dma.done [#allocation3], 256
    $region21: #{tpu_custom_call.1} parent=1 // pred_fallthru
      _
    // Predicated region
    $region22: #{tpu_custom_call.1} parent=1 // pred_check
      _
    $region23: #{tpu_custom_call.1} parent=1 // pred_check_branch
      %63 = sbr.rel (0) target = $region25
    $region24: #{tpu_custom_call.1} parent=1 // pred_region
      %64 = dma.done [#allocation6], 256
    $region25: #{tpu_custom_call.1} parent=1 // pred_fallthru
      _
    // Predicated region
    $region26: #{tpu_custom_call.1} parent=1 // pred_check
      _
    $region27: #{tpu_custom_call.1} parent=1 // pred_check_branch
      %66 = sbr.rel (0) target = $region29
    $region28: #{tpu_custom_call.1} parent=1 // pred_region
      %67 = dma.done [#allocation6], 1792
    $region29: #{tpu_custom_call.1} parent=1 // pred_fallthru
      _
    // Predicated region
    $region30: #{tpu_custom_call.1} parent=1 // pred_check
      _
    $region31: #{tpu_custom_call.1} parent=1 // pred_check_branch
      %69 = sbr.rel (0) target = $region33
    $region32: #{tpu_custom_call.1} parent=1 // pred_region
      %70 = dma.done [#allocation9], 128
    $region33: #{tpu_custom_call.1} parent=1 // pred_fallthru
      _
    %v72 = vld [vmem:[#allocation2] sm:$0xff]
    %v73 = vld [vmem:[#allocation2 + $0x8] sm:$0xff]
    %v74 = vld [vmem:[#allocation8] sm:$0x1]
    %v75 = vld [vmem:[#allocation8 + $0x1] sm:$0x1]
    %v76 = vld [vmem:[#allocation8 + $0x2] sm:$0x1]
    %v77 = vld [vmem:[#allocation8 + $0x3] sm:$0x1]
    %v78 = vld [vmem:[#allocation8 + $0x4] sm:$0x1]
    %v79 = vld [vmem:[#allocation8 + $0x5] sm:$0x1]
    %v80 = vld [vmem:[#allocation8 + $0x6] sm:$0x1]
    %v81 = vld [vmem:[#allocation8 + $0x7] sm:$0x1]
    %v82 = vld [vmem:[#allocation7] sm:$0xf]
    %v83 = vld [vmem:[#allocation7 + $0x4] sm:$0xf]
    %v84 = vld [vmem:[#allocation7 + $0x8] sm:$0xf]
    %v85 = vld [vmem:[#allocation7 + $0xc] sm:$0xf]
    %v86 = vld [vmem:[#allocation7 + $0x10] sm:$0xf]
    %v87 = vld [vmem:[#allocation7 + $0x14] sm:$0xf]
    %v88 = vld [vmem:[#allocation7 + $0x18] sm:$0xf]
    %v89 = vld [vmem:[#allocation7 + $0x1c] sm:$0xf]
    %v90 = vld [vmem:[#allocation7 + $0x20] sm:$0xf]
    %v91 = vld [vmem:[#allocation7 + $0x24] sm:$0xf]
    %v92 = vld [vmem:[#allocation7 + $0x28] sm:$0xf]
    %v93 = vld [vmem:[#allocation7 + $0x2c] sm:$0xf]
    %v94 = vld [vmem:[#allocation7 + $0x30] sm:$0xf]
    %v95 = vld [vmem:[#allocation7 + $0x34] sm:$0xf]
    %v96 = vld [vmem:[#allocation7 + $0x38] sm:$0xf]
    %v97 = vld [vmem:[#allocation7 + $0x3c] sm:$0xf]
    %v98 = vld [vmem:[#allocation7 + $0x40] sm:$0xf]
    %v99 = vld [vmem:[#allocation7 + $0x44] sm:$0xf]
    %v100 = vld [vmem:[#allocation7 + $0x48] sm:$0xf]
    %v101 = vld [vmem:[#allocation7 + $0x4c] sm:$0xf]
    %v102 = vld [vmem:[#allocation7 + $0x50] sm:$0xf]
    %v103 = vld [vmem:[#allocation7 + $0x54] sm:$0xf]
    %v104 = vld [vmem:[#allocation7 + $0x58] sm:$0xf]
    %v105 = vld [vmem:[#allocation7 + $0x5c] sm:$0xf]
    %v106 = vld [vmem:[#allocation7 + $0x60] sm:$0xf]
    %v107 = vld [vmem:[#allocation7 + $0x64] sm:$0xf]
    %v108 = vld [vmem:[#allocation7 + $0x68] sm:$0xf]
    %v109 = vld [vmem:[#allocation7 + $0x6c] sm:$0xf]
    %v110 = vld [vmem:[#allocation5] sm:$0xff]
    %v111 = vld [vmem:[#allocation5 + $0x8] sm:$0xff]
    %vm112 = vcmask 261120
    %v113 = vsel %vm112, %v72, 0.0
    %114 = vadd.xlane.f32.xlu0 %v113
    %v115 = vpop.xlane.xlu0 %114
    %v116 = vsel %vm112, %v73, 0.0
    %117 = vadd.xlane.f32.xlu0 %v116
    %v118 = vpop.xlane.xlu0 %117
    %v119 = vrcp.pop 32.0
    %v120 = vmul.f32 %v115, %v119
    %v121 = vmul.f32 %v118, %v119
    %v122 = vsub.f32 %v72, %v120
    %v123 = vsub.f32 %v73, %v121
    %v124 = vmul.f32 %v122, %v122
    %v125 = vmul.f32 %v123, %v123
    %v126 = vsel %vm112, %v124, 0.0
    %127 = vadd.xlane.f32.xlu0 %v126
    %v128 = vpop.xlane.xlu0 %127
    %v129 = vsel %vm112, %v125, 0.0
    %130 = vadd.xlane.f32.xlu0 %v129
    %v131 = vpop.xlane.xlu0 %130
    %v132 = vmul.f32 %v128, %v119
    %v133 = vmul.f32 %v131, %v119
    %v134 = vadd.f32 %v132, 1e-05
    %v135 = vadd.f32 %v133, 1e-05
    %v136 = vrsqrt.pop %v134
    %v137 = vrsqrt.pop %v135
    %v138 = vmul.f32 %v122, %v136
    %v139 = vmul.f32 %v123, %v137
    %v140 = vlaneseq
    %v141 = vshrl.u32 %v140, 7
    %v142 = vsub.s32 0, %v141
    %v143 = vrot.slane %v74, %v142
    %v144 = vmul.f32 %v138, %v143
    %v145 = vmul.f32 %v139, %v143
    %v146 = vlaneseq
    %v147 = vshrl.u32 %v146, 7
    %v148 = vsub.s32 0, %v147
    %v149 = vrot.slane %v75, %v148
    %v150 = vadd.f32 %v144, %v149
    %v151 = vadd.f32 %v145, %v149
    %v152 = vpack.c.bf16 %v151, %v150
    %v153 = vlaneseq
    %v154 = vshrl.u32 %v153, 7
    %v155 = vsub.s32 0, %v154
    %v156 = vrot.slane %v80, %v155
    %v161 = vunpack.c.l.b16 %v82
    %v162 = vunpack.c.l.b16 %v83
    %v163 = vunpack.c.l.b16 %v84
    %v164 = vunpack.c.l.b16 %v85
    %v165 = vpack.c.b16 %v162, %v161
    %v166 = vpack.c.b16 %v164, %v163
    %v170 = vsel %vm112, %v152, 0
    %172 = vmatprep.subr.bf16.mxu0 0
    %173 = vmatpush1.bf16.msra.mxu0 0
    %174 = vmatprep.subr.bf16.mxu0 0
    %175 = vmatpush1.bf16.msra.mxu0 0
    %176 = vmatprep.subr.bf16.mxu0 0
    %177 = vmatpush1.bf16.msra.mxu0 0
    %178 = vmatprep.subr.bf16.mxu0 0
    %179 = vmatpush1.bf16.msra.mxu0 0
    %180 = vmatprep.subr.bf16.mxu0 0
    %181 = vmatpush1.bf16.msra.mxu0 0
    %182 = vmatprep.subr.bf16.mxu0 0
    %183 = vmatpush1.bf16.msra.mxu0 0
    %184 = vmatprep.subr.bf16.mxu0 0
    %185 = vmatpush1.bf16.msra.mxu0 %v166
    %186 = vmatprep.subr.bf16.mxu0 0
    %187 = vmatpush1.bf16.msra.mxu0 %v165
    %188 = vmatprep.subr.bf16.mxu0 0
    %189 = vmatpush2.bf16.msra.mxu0 0
    %190 = vmatprep.subr.bf16.mxu0 0
    %191 = vmatpush2.bf16.msra.mxu0 0
    %192 = vmatprep.subr.bf16.mxu0 0
    %193 = vmatpush2.bf16.msra.mxu0 0
    %194 = vmatprep.subr.bf16.mxu0 0
    %195 = vmatpush2.bf16.msra.mxu0 0
    %196 = vmatprep.subr.bf16.mxu0 0
    %197 = vmatpush2.bf16.msra.mxu0 0
    %198 = vmatprep.subr.bf16.mxu0 0
    %199 = vmatpush2.bf16.msra.mxu0 0
    %200 = vmatprep.subr.bf16.mxu0 0
    %201 = vmatpush2.bf16.msra.mxu0 0
    %202 = vmatprep.subr.bf16.mxu0 0
    %203 = vmatpush2.bf16.msra.mxu0 0
    %204 = vmatprep.mubr.bf16.mxu0 0
    %205 = vmatmul.mubr.bf16.gmra.mxu0 %v170
    %v206 = vpop.f32.mrf.mxu0
    %v207 = vadd.f32 %v156, %v206
    %v208 = vpop.f32.mrf.mxu0
    %v209 = vpop.f32.mrf.mxu0
    %v210 = vadd.f32 %v156, %v209
    %v211 = vpop.f32.mrf.mxu0
    %212 = vdwg.mxu0
    %v213 = vpack.c.bf16 %v210, %v207
    %215 = vrot.lane.b32.xlu0 %v213, 96
    %v216 = vpop.permute.xlu0 %215
    %vm217 = vcmask 64512
    %v219 = vsel %vm217, %v213, 0
    %v222 = vsel %vm217, %v216, 0
    %224 = vmatprep.subr.bf16.mxu0 0
    %225 = vmatpush1.bf16.xpose.msra.mxu0 0
    %226 = vmatprep.subr.bf16.mxu0 0
    %227 = vmatpush1.bf16.xpose.msra.mxu0 0
    %228 = vmatprep.subr.bf16.mxu0 0
    %229 = vmatpush1.bf16.xpose.msra.mxu0 0
    %230 = vmatprep.subr.bf16.mxu0 0
    %231 = vmatpush1.bf16.xpose.msra.mxu0 0
    %232 = vmatprep.subr.bf16.mxu0 0
    %233 = vmatpush1.bf16.xpose.msra.mxu0 0
    %234 = vmatprep.subr.bf16.mxu0 0
    %235 = vmatpush1.bf16.xpose.msra.mxu0 0
    %236 = vmatprep.subr.bf16.mxu0 0
    %237 = vmatpush1.bf16.xpose.msra.mxu0 0
    %238 = vmatprep.subr.bf16.mxu0 0
    %239 = vmatpush1.bf16.xpose.msra.mxu0 %v222
    %240 = vmatprep.subr.bf16.mxu0 0
    %241 = vmatpush2.bf16.xpose.msra.mxu0 0
    %242 = vmatprep.subr.bf16.mxu0 0
    %243 = vmatpush2.bf16.xpose.msra.mxu0 0
    %244 = vmatprep.subr.bf16.mxu0 0
    %245 = vmatpush2.bf16.xpose.msra.mxu0 0
    %246 = vmatprep.subr.bf16.mxu0 0
    %247 = vmatpush2.bf16.xpose.msra.mxu0 0
    %248 = vmatprep.subr.bf16.mxu0 0
    %249 = vmatpush2.bf16.xpose.msra.mxu0 0
    %250 = vmatprep.subr.bf16.mxu0 0
    %251 = vmatpush2.bf16.xpose.msra.mxu0 0
    %252 = vmatprep.subr.bf16.mxu0 0
    %253 = vmatpush2.bf16.xpose.msra.mxu0 0
    %254 = vmatprep.subr.bf16.mxu0 0
    %255 = vmatpush2.bf16.xpose.msra.mxu0 0
    %256 = vmatprep.mubr.bf16.mxu0 0
    %257 = vmatmul.mubr.bf16.gmra.mxu0 %v219
    %v258 = vpop.f32.mrf.mxu0
    %v259 = vadd.f32 %v110, %v258
    %v260 = vpop.f32.mrf.mxu0
    %v261 = vpop.f32.mrf.mxu0
    %v262 = vadd.f32 %v111, %v261
    %v263 = vpop.f32.mrf.mxu0
    %264 = vdwg.mxu0
    %vm265 = vcmask 130048
    %v266 = vsel %vm265, %v259, -inf
    %267 = vmax.xlane.f32.xlu0 %v266
    %v268 = vpop.xlane.xlu0 %267
    %v269 = vsel %vm265, %v262, -inf
    %270 = vmax.xlane.f32.xlu0 %v269
    %v271 = vpop.xlane.xlu0 %270
    %v272 = vsub.f32 %v259, %v268
    %v273 = vsub.f32 %v262, %v271
    %v274 = vmul.f32 %v272, 1.442695
    %v275 = vpow.pop %v274
    %v276 = vmul.f32 %v273, 1.442695
    %v277 = vpow.pop %v276
    %v278 = vsel %vm265, %v275, 0.0
    %279 = vadd.xlane.f32.xlu0 %v278
    %v280 = vpop.xlane.xlu0 %279
    %v281 = vsel %vm265, %v277, 0.0
    %282 = vadd.xlane.f32.xlu0 %v281
    %v283 = vpop.xlane.xlu0 %282
    %v284 = vrcp.pop %v280
    %v285 = vrcp.pop %v283
    %v286 = vmul.f32 %v275, %v284
    %v287 = vmul.f32 %v277, %v285
    %v288 = vpack.c.bf16 %v287, %v286
    %289 = vrot.lane.b32.xlu0 %v213, 64
    %v290 = vpop.permute.xlu0 %289
    %v293 = vsel %vm265, %v288, 0
    %295 = vmatprep.subr.bf16.mxu0 0
    %296 = vmatpush1.bf16.msra.mxu0 0
    %297 = vmatprep.subr.bf16.mxu0 0
    %298 = vmatpush1.bf16.msra.mxu0 0
    %299 = vmatprep.subr.bf16.mxu0 0
    %300 = vmatpush1.bf16.msra.mxu0 0
    %301 = vmatprep.subr.bf16.mxu0 0
    %302 = vmatpush1.bf16.msra.mxu0 0
    %303 = vmatprep.subr.bf16.mxu0 0
    %304 = vmatpush1.bf16.msra.mxu0 0
    %305 = vmatprep.subr.bf16.mxu0 0
    %306 = vmatpush1.bf16.msra.mxu0 0
    %307 = vmatprep.subr.bf16.mxu0 0
    %308 = vmatpush1.bf16.msra.mxu0 0
    %309 = vmatprep.subr.bf16.mxu0 0
    %310 = vmatpush1.bf16.msra.mxu0 %v290
    %311 = vmatprep.subr.bf16.mxu0 0
    %312 = vmatpush2.bf16.msra.mxu0 0
    %313 = vmatprep.subr.bf16.mxu0 0
    %314 = vmatpush2.bf16.msra.mxu0 0
    %315 = vmatprep.subr.bf16.mxu0 0
    %316 = vmatpush2.bf16.msra.mxu0 0
    %317 = vmatprep.subr.bf16.mxu0 0
    %318 = vmatpush2.bf16.msra.mxu0 0
    %319 = vmatprep.subr.bf16.mxu0 0
    %320 = vmatpush2.bf16.msra.mxu0 0
    %321 = vmatprep.subr.bf16.mxu0 0
    %322 = vmatpush2.bf16.msra.mxu0 0
    %323 = vmatprep.subr.bf16.mxu0 0
    %324 = vmatpush2.bf16.msra.mxu0 0
    %325 = vmatprep.subr.bf16.mxu0 0
    %326 = vmatpush2.bf16.msra.mxu0 0
    %327 = vmatprep.mubr.bf16.mxu0 0
    %328 = vmatmul.mubr.bf16.gmra.mxu0 %v293
    %v329 = vpop.f32.mrf.mxu0
    %v330 = vadd.f32 0.0, %v329
    %v331 = vpop.f32.mrf.mxu0
    %v332 = vpop.f32.mrf.mxu0
    %v333 = vadd.f32 0.0, %v332
    %v334 = vpop.f32.mrf.mxu0
    %335 = vdwg.mxu0
    %336 = vrot.lane.b32.xlu0 %v213, 120
    %v337 = vpop.permute.xlu0 %336
    %338 = vrot.lane.b32.xlu0 %v213, 88
    %v339 = vpop.permute.xlu0 %338
    %v341 = vsel %vm217, %v337, 0
    %v344 = vsel %vm217, %v339, 0
    %346 = vmatprep.subr.bf16.mxu0 0
    %347 = vmatpush1.bf16.xpose.msra.mxu0 0
    %348 = vmatprep.subr.bf16.mxu0 0
    %349 = vmatpush1.bf16.xpose.msra.mxu0 0
    %350 = vmatprep.subr.bf16.mxu0 0
    %351 = vmatpush1.bf16.xpose.msra.mxu0 0
    %352 = vmatprep.subr.bf16.mxu0 0
    %353 = vmatpush1.bf16.xpose.msra.mxu0 0
    %354 = vmatprep.subr.bf16.mxu0 0
    %355 = vmatpush1.bf16.xpose.msra.mxu0 0
    %356 = vmatprep.subr.bf16.mxu0 0
    %357 = vmatpush1.bf16.xpose.msra.mxu0 0
    %358 = vmatprep.subr.bf16.mxu0 0
    %359 = vmatpush1.bf16.xpose.msra.mxu0 0
    %360 = vmatprep.subr.bf16.mxu0 0
    %361 = vmatpush1.bf16.xpose.msra.mxu0 %v344
    %362 = vmatprep.subr.bf16.mxu0 0
    %363 = vmatpush2.bf16.xpose.msra.mxu0 0
    %364 = vmatprep.subr.bf16.mxu0 0
    %365 = vmatpush2.bf16.xpose.msra.mxu0 0
    %366 = vmatprep.subr.bf16.mxu0 0
    %367 = vmatpush2.bf16.xpose.msra.mxu0 0
    %368 = vmatprep.subr.bf16.mxu0 0
    %369 = vmatpush2.bf16.xpose.msra.mxu0 0
    %370 = vmatprep.subr.bf16.mxu0 0
    %371 = vmatpush2.bf16.xpose.msra.mxu0 0
    %372 = vmatprep.subr.bf16.mxu0 0
    %373 = vmatpush2.bf16.xpose.msra.mxu0 0
    %374 = vmatprep.subr.bf16.mxu0 0
    %375 = vmatpush2.bf16.xpose.msra.mxu0 0
    %376 = vmatprep.subr.bf16.mxu0 0
    %377 = vmatpush2.bf16.xpose.msra.mxu0 0
    %378 = vmatprep.mubr.bf16.mxu0 0
    %379 = vmatmul.mubr.bf16.gmra.mxu0 %v341
    %v380 = vpop.f32.mrf.mxu0
    %v381 = vadd.f32 %v110, %v380
    %v382 = vpop.f32.mrf.mxu0
    %v383 = vpop.f32.mrf.mxu0
    %v384 = vadd.f32 %v111, %v383
    %v385 = vpop.f32.mrf.mxu0
    %386 = vdwg.mxu0
    %v387 = vsel %vm265, %v381, -inf
    %388 = vmax.xlane.f32.xlu0 %v387
    %v389 = vpop.xlane.xlu0 %388
    %v390 = vsel %vm265, %v384, -inf
    %391 = vmax.xlane.f32.xlu0 %v390
    %v392 = vpop.xlane.xlu0 %391
    %v393 = vsub.f32 %v381, %v389
    %v394 = vsub.f32 %v384, %v392
    %v395 = vmul.f32 %v393, 1.442695
    %v396 = vpow.pop %v395
    %v397 = vmul.f32 %v394, 1.442695
    %v398 = vpow.pop %v397
    %v399 = vsel %vm265, %v396, 0.0
    %400 = vadd.xlane.f32.xlu0 %v399
    %v401 = vpop.xlane.xlu0 %400
    %v402 = vsel %vm265, %v398, 0.0
    %403 = vadd.xlane.f32.xlu0 %v402
    %v404 = vpop.xlane.xlu0 %403
    %v405 = vrcp.pop %v401
    %v406 = vrcp.pop %v404
    %v407 = vmul.f32 %v396, %v405
    %v408 = vmul.f32 %v398, %v406
    %v409 = vpack.c.bf16 %v408, %v407
    %410 = vrot.lane.b32.xlu0 %v213, 56
    %v411 = vpop.permute.xlu0 %410
    %v414 = vsel %vm265, %v409, 0
    %416 = vmatprep.subr.bf16.mxu0 0
    %417 = vmatpush1.bf16.msra.mxu0 0
    %418 = vmatprep.subr.bf16.mxu0 0
    %419 = vmatpush1.bf16.msra.mxu0 0
    %420 = vmatprep.subr.bf16.mxu0 0
    %421 = vmatpush1.bf16.msra.mxu0 0
    %422 = vmatprep.subr.bf16.mxu0 0
    %423 = vmatpush1.bf16.msra.mxu0 0
    %424 = vmatprep.subr.bf16.mxu0 0
    %425 = vmatpush1.bf16.msra.mxu0 0
    %426 = vmatprep.subr.bf16.mxu0 0
    %427 = vmatpush1.bf16.msra.mxu0 0
    %428 = vmatprep.subr.bf16.mxu0 0
    %429 = vmatpush1.bf16.msra.mxu0 0
    %430 = vmatprep.subr.bf16.mxu0 0
    %431 = vmatpush1.bf16.msra.mxu0 %v411
    %432 = vmatprep.subr.bf16.mxu0 0
    %433 = vmatpush2.bf16.msra.mxu0 0
    %434 = vmatprep.subr.bf16.mxu0 0
    %435 = vmatpush2.bf16.msra.mxu0 0
    %436 = vmatprep.subr.bf16.mxu0 0
    %437 = vmatpush2.bf16.msra.mxu0 0
    %438 = vmatprep.subr.bf16.mxu0 0
    %439 = vmatpush2.bf16.msra.mxu0 0
    %440 = vmatprep.subr.bf16.mxu0 0
    %441 = vmatpush2.bf16.msra.mxu0 0
    %442 = vmatprep.subr.bf16.mxu0 0
    %443 = vmatpush2.bf16.msra.mxu0 0
    %444 = vmatprep.subr.bf16.mxu0 0
    %445 = vmatpush2.bf16.msra.mxu0 0
    %446 = vmatprep.subr.bf16.mxu0 0
    %447 = vmatpush2.bf16.msra.mxu0 0
    %448 = vmatprep.mubr.bf16.mxu0 0
    %449 = vmatmul.mubr.bf16.gmra.mxu0 %v414
    %v450 = vpop.f32.mrf.mxu0
    %v451 = vadd.f32 0.0, %v450
    %v452 = vpop.f32.mrf.mxu0
    %v453 = vpop.f32.mrf.mxu0
    %v454 = vadd.f32 0.0, %v453
    %v455 = vpop.f32.mrf.mxu0
    %456 = vdwg.mxu0
    %457 = vrot.lane.b32.xlu0 %v213, 112
    %v458 = vpop.permute.xlu0 %457
    %459 = vrot.lane.b32.xlu0 %v213, 80
    %v460 = vpop.permute.xlu0 %459
    %v462 = vsel %vm217, %v458, 0
    %v465 = vsel %vm217, %v460, 0
    %467 = vmatprep.subr.bf16.mxu0 0
    %468 = vmatpush1.bf16.xpose.msra.mxu0 0
    %469 = vmatprep.subr.bf16.mxu0 0
    %470 = vmatpush1.bf16.xpose.msra.mxu0 0
    %471 = vmatprep.subr.bf16.mxu0 0
    %472 = vmatpush1.bf16.xpose.msra.mxu0 0
    %473 = vmatprep.subr.bf16.mxu0 0
    %474 = vmatpush1.bf16.xpose.msra.mxu0 0
    %475 = vmatprep.subr.bf16.mxu0 0
    %476 = vmatpush1.bf16.xpose.msra.mxu0 0
    %477 = vmatprep.subr.bf16.mxu0 0
    %478 = vmatpush1.bf16.xpose.msra.mxu0 0
    %479 = vmatprep.subr.bf16.mxu0 0
    %480 = vmatpush1.bf16.xpose.msra.mxu0 0
    %481 = vmatprep.subr.bf16.mxu0 0
    %482 = vmatpush1.bf16.xpose.msra.mxu0 %v465
    %483 = vmatprep.subr.bf16.mxu0 0
    %484 = vmatpush2.bf16.xpose.msra.mxu0 0
    %485 = vmatprep.subr.bf16.mxu0 0
    %486 = vmatpush2.bf16.xpose.msra.mxu0 0
    %487 = vmatprep.subr.bf16.mxu0 0
    %488 = vmatpush2.bf16.xpose.msra.mxu0 0
    %489 = vmatprep.subr.bf16.mxu0 0
    %490 = vmatpush2.bf16.xpose.msra.mxu0 0
    %491 = vmatprep.subr.bf16.mxu0 0
    %492 = vmatpush2.bf16.xpose.msra.mxu0 0
    %493 = vmatprep.subr.bf16.mxu0 0
    %494 = vmatpush2.bf16.xpose.msra.mxu0 0
    %495 = vmatprep.subr.bf16.mxu0 0
    %496 = vmatpush2.bf16.xpose.msra.mxu0 0
    %497 = vmatprep.subr.bf16.mxu0 0
    %498 = vmatpush2.bf16.xpose.msra.mxu0 0
    %499 = vmatprep.mubr.bf16.mxu0 0
    %500 = vmatmul.mubr.bf16.gmra.mxu0 %v462
    %v501 = vpop.f32.mrf.mxu0
    %v502 = vadd.f32 %v110, %v501
    %v503 = vpop.f32.mrf.mxu0
    %v504 = vpop.f32.mrf.mxu0
    %v505 = vadd.f32 %v111, %v504
    %v506 = vpop.f32.mrf.mxu0
    %507 = vdwg.mxu0
    %v508 = vsel %vm265, %v502, -inf
    %509 = vmax.xlane.f32.xlu0 %v508
    %v510 = vpop.xlane.xlu0 %509
    %v511 = vsel %vm265, %v505, -inf
    %512 = vmax.xlane.f32.xlu0 %v511
    %v513 = vpop.xlane.xlu0 %512
    %v514 = vsub.f32 %v502, %v510
    %v515 = vsub.f32 %v505, %v513
    %v516 = vmul.f32 %v514, 1.442695
    %v517 = vpow.pop %v516
    %v518 = vmul.f32 %v515, 1.442695
    %v519 = vpow.pop %v518
    %v520 = vsel %vm265, %v517, 0.0
    %521 = vadd.xlane.f32.xlu0 %v520
    %v522 = vpop.xlane.xlu0 %521
    %v523 = vsel %vm265, %v519, 0.0
    %524 = vadd.xlane.f32.xlu0 %v523
    %v525 = vpop.xlane.xlu0 %524
    %v526 = vrcp.pop %v522
    %v527 = vrcp.pop %v525
    %v528 = vmul.f32 %v517, %v526
    %v529 = vmul.f32 %v519, %v527
    %v530 = vpack.c.bf16 %v529, %v528
    %531 = vrot.lane.b32.xlu0 %v213, 48
    %v532 = vpop.permute.xlu0 %531
    %v535 = vsel %vm265, %v530, 0
    %537 = vmatprep.subr.bf16.mxu0 0
    %538 = vmatpush1.bf16.msra.mxu0 0
    %539 = vmatprep.subr.bf16.mxu0 0
    %540 = vmatpush1.bf16.msra.mxu0 0
    %541 = vmatprep.subr.bf16.mxu0 0
    %542 = vmatpush1.bf16.msra.mxu0 0
    %543 = vmatprep.subr.bf16.mxu0 0
    %544 = vmatpush1.bf16.msra.mxu0 0
    %545 = vmatprep.subr.bf16.mxu0 0
    %546 = vmatpush1.bf16.msra.mxu0 0
    %547 = vmatprep.subr.bf16.mxu0 0
    %548 = vmatpush1.bf16.msra.mxu0 0
    %549 = vmatprep.subr.bf16.mxu0 0
    %550 = vmatpush1.bf16.msra.mxu0 0
    %551 = vmatprep.subr.bf16.mxu0 0
    %552 = vmatpush1.bf16.msra.mxu0 %v532
    %553 = vmatprep.subr.bf16.mxu0 0
    %554 = vmatpush2.bf16.msra.mxu0 0
    %555 = vmatprep.subr.bf16.mxu0 0
    %556 = vmatpush2.bf16.msra.mxu0 0
    %557 = vmatprep.subr.bf16.mxu0 0
    %558 = vmatpush2.bf16.msra.mxu0 0
    %559 = vmatprep.subr.bf16.mxu0 0
    %560 = vmatpush2.bf16.msra.mxu0 0
    %561 = vmatprep.subr.bf16.mxu0 0
    %562 = vmatpush2.bf16.msra.mxu0 0
    %563 = vmatprep.subr.bf16.mxu0 0
    %564 = vmatpush2.bf16.msra.mxu0 0
    %565 = vmatprep.subr.bf16.mxu0 0
    %566 = vmatpush2.bf16.msra.mxu0 0
    %567 = vmatprep.subr.bf16.mxu0 0
    %568 = vmatpush2.bf16.msra.mxu0 0
    %569 = vmatprep.mubr.bf16.mxu0 0
    %570 = vmatmul.mubr.bf16.gmra.mxu0 %v535
    %v571 = vpop.f32.mrf.mxu0
    %v572 = vadd.f32 0.0, %v571
    %v573 = vpop.f32.mrf.mxu0
    %v574 = vpop.f32.mrf.mxu0
    %v575 = vadd.f32 0.0, %v574
    %v576 = vpop.f32.mrf.mxu0
    %577 = vdwg.mxu0
    %578 = vrot.lane.b32.xlu0 %v213, 104
    %v579 = vpop.permute.xlu0 %578
    %580 = vrot.lane.b32.xlu0 %v213, 72
    %v581 = vpop.permute.xlu0 %580
    %v583 = vsel %vm217, %v579, 0
    %v586 = vsel %vm217, %v581, 0
    %588 = vmatprep.subr.bf16.mxu0 0
    %589 = vmatpush1.bf16.xpose.msra.mxu0 0
    %590 = vmatprep.subr.bf16.mxu0 0
    %591 = vmatpush1.bf16.xpose.msra.mxu0 0
    %592 = vmatprep.subr.bf16.mxu0 0
    %593 = vmatpush1.bf16.xpose.msra.mxu0 0
    %594 = vmatprep.subr.bf16.mxu0 0
    %595 = vmatpush1.bf16.xpose.msra.mxu0 0
    %596 = vmatprep.subr.bf16.mxu0 0
    %597 = vmatpush1.bf16.xpose.msra.mxu0 0
    %598 = vmatprep.subr.bf16.mxu0 0
    %599 = vmatpush1.bf16.xpose.msra.mxu0 0
    %600 = vmatprep.subr.bf16.mxu0 0
    %601 = vmatpush1.bf16.xpose.msra.mxu0 0
    %602 = vmatprep.subr.bf16.mxu0 0
    %603 = vmatpush1.bf16.xpose.msra.mxu0 %v586
    %604 = vmatprep.subr.bf16.mxu0 0
    %605 = vmatpush2.bf16.xpose.msra.mxu0 0
    %606 = vmatprep.subr.bf16.mxu0 0
    %607 = vmatpush2.bf16.xpose.msra.mxu0 0
    %608 = vmatprep.subr.bf16.mxu0 0
    %609 = vmatpush2.bf16.xpose.msra.mxu0 0
    %610 = vmatprep.subr.bf16.mxu0 0
    %611 = vmatpush2.bf16.xpose.msra.mxu0 0
    %612 = vmatprep.subr.bf16.mxu0 0
    %613 = vmatpush2.bf16.xpose.msra.mxu0 0
    %614 = vmatprep.subr.bf16.mxu0 0
    %615 = vmatpush2.bf16.xpose.msra.mxu0 0
    %616 = vmatprep.subr.bf16.mxu0 0
    %617 = vmatpush2.bf16.xpose.msra.mxu0 0
    %618 = vmatprep.subr.bf16.mxu0 0
    %619 = vmatpush2.bf16.xpose.msra.mxu0 0
    %620 = vmatprep.mubr.bf16.mxu0 0
    %621 = vmatmul.mubr.bf16.gmra.mxu0 %v583
    %v622 = vpop.f32.mrf.mxu0
    %v623 = vadd.f32 %v110, %v622
    %v624 = vpop.f32.mrf.mxu0
    %v625 = vpop.f32.mrf.mxu0
    %v626 = vadd.f32 %v111, %v625
    %v627 = vpop.f32.mrf.mxu0
    %628 = vdwg.mxu0
    %v629 = vsel %vm265, %v623, -inf
    %630 = vmax.xlane.f32.xlu0 %v629
    %v631 = vpop.xlane.xlu0 %630
    %v632 = vsel %vm265, %v626, -inf
    %633 = vmax.xlane.f32.xlu0 %v632
    %v634 = vpop.xlane.xlu0 %633
    %v635 = vsub.f32 %v623, %v631
    %v636 = vsub.f32 %v626, %v634
    %v637 = vmul.f32 %v635, 1.442695
    %v638 = vpow.pop %v637
    %v639 = vmul.f32 %v636, 1.442695
    %v640 = vpow.pop %v639
    %v641 = vsel %vm265, %v638, 0.0
    %642 = vadd.xlane.f32.xlu0 %v641
    %v643 = vpop.xlane.xlu0 %642
    %v644 = vsel %vm265, %v640, 0.0
    %645 = vadd.xlane.f32.xlu0 %v644
    %v646 = vpop.xlane.xlu0 %645
    %v647 = vrcp.pop %v643
    %v648 = vrcp.pop %v646
    %v649 = vmul.f32 %v638, %v647
    %v650 = vmul.f32 %v640, %v648
    %v651 = vpack.c.bf16 %v650, %v649
    %652 = vrot.lane.b32.xlu0 %v213, 40
    %v653 = vpop.permute.xlu0 %652
    %v656 = vsel %vm265, %v651, 0
    %658 = vmatprep.subr.bf16.mxu0 0
    %659 = vmatpush1.bf16.msra.mxu0 0
    %660 = vmatprep.subr.bf16.mxu0 0
    %661 = vmatpush1.bf16.msra.mxu0 0
    %662 = vmatprep.subr.bf16.mxu0 0
    %663 = vmatpush1.bf16.msra.mxu0 0
    %664 = vmatprep.subr.bf16.mxu0 0
    %665 = vmatpush1.bf16.msra.mxu0 0
    %666 = vmatprep.subr.bf16.mxu0 0
    %667 = vmatpush1.bf16.msra.mxu0 0
    %668 = vmatprep.subr.bf16.mxu0 0
    %669 = vmatpush1.bf16.msra.mxu0 0
    %670 = vmatprep.subr.bf16.mxu0 0
    %671 = vmatpush1.bf16.msra.mxu0 0
    %672 = vmatprep.subr.bf16.mxu0 0
    %673 = vmatpush1.bf16.msra.mxu0 %v653
    %674 = vmatprep.subr.bf16.mxu0 0
    %675 = vmatpush2.bf16.msra.mxu0 0
    %676 = vmatprep.subr.bf16.mxu0 0
    %677 = vmatpush2.bf16.msra.mxu0 0
    %678 = vmatprep.subr.bf16.mxu0 0
    %679 = vmatpush2.bf16.msra.mxu0 0
    %680 = vmatprep.subr.bf16.mxu0 0
    %681 = vmatpush2.bf16.msra.mxu0 0
    %682 = vmatprep.subr.bf16.mxu0 0
    %683 = vmatpush2.bf16.msra.mxu0 0
    %684 = vmatprep.subr.bf16.mxu0 0
    %685 = vmatpush2.bf16.msra.mxu0 0
    %686 = vmatprep.subr.bf16.mxu0 0
    %687 = vmatpush2.bf16.msra.mxu0 0
    %688 = vmatprep.subr.bf16.mxu0 0
    %689 = vmatpush2.bf16.msra.mxu0 0
    %690 = vmatprep.mubr.bf16.mxu0 0
    %691 = vmatmul.mubr.bf16.gmra.mxu0 %v656
    %v692 = vpop.f32.mrf.mxu0
    %v693 = vadd.f32 0.0, %v692
    %v694 = vpop.f32.mrf.mxu0
    %v695 = vpop.f32.mrf.mxu0
    %v696 = vadd.f32 0.0, %v695
    %v697 = vpop.f32.mrf.mxu0
    %698 = vdwg.mxu0
    %701 = vrot.lane.b32.xlu0 %v451, 8
    %v702 = vpop.permute.xlu0 %701
    %703 = vrot.lane.b32.xlu0 %v454, 8
    %v704 = vpop.permute.xlu0 %703
    %709 = vrot.lane.b32.xlu0 %v572, 16
    %v710 = vpop.permute.xlu0 %709
    %711 = vrot.lane.b32.xlu0 %v575, 16
    %v712 = vpop.permute.xlu0 %711
    %717 = vrot.lane.b32.xlu0 %v693, 24
    %v718 = vpop.permute.xlu0 %717
    %719 = vrot.lane.b32.xlu0 %v696, 24
    %v720 = vpop.permute.xlu0 %719
    %v723 = vsel %vm217, %v330, %v702
    %v724 = vsel %vm217, %v333, %v704
    %v725 = vsel %vm265, %v723, %v710
    %v726 = vsel %vm265, %v724, %v712
    %vm727 = vcmask 195584
    %v728 = vsel %vm727, %v725, %v718
    %v729 = vsel %vm727, %v726, %v720
    %v730 = vpack.c.bf16 %v729, %v728
    %v735 = vunpack.c.l.b16 %v86
    %v736 = vunpack.c.l.b16 %v87
    %v737 = vunpack.c.l.b16 %v88
    %v738 = vunpack.c.l.b16 %v89
    %v739 = vpack.c.b16 %v736, %v735
    %v740 = vpack.c.b16 %v738, %v737
    %v744 = vsel %vm112, %v730, 0
    %746 = vmatprep.subr.bf16.mxu0 0
    %747 = vmatpush1.bf16.msra.mxu0 0
    %748 = vmatprep.subr.bf16.mxu0 0
    %749 = vmatpush1.bf16.msra.mxu0 0
    %750 = vmatprep.subr.bf16.mxu0 0
    %751 = vmatpush1.bf16.msra.mxu0 0
    %752 = vmatprep.subr.bf16.mxu0 0
    %753 = vmatpush1.bf16.msra.mxu0 0
    %754 = vmatprep.subr.bf16.mxu0 0
    %755 = vmatpush1.bf16.msra.mxu0 0
    %756 = vmatprep.subr.bf16.mxu0 0
    %757 = vmatpush1.bf16.msra.mxu0 0
    %758 = vmatprep.subr.bf16.mxu0 0
    %759 = vmatpush1.bf16.msra.mxu0 %v740
    %760 = vmatprep.subr.bf16.mxu0 0
    %761 = vmatpush1.bf16.msra.mxu0 %v739
    %762 = vmatprep.subr.bf16.mxu0 0
    %763 = vmatpush2.bf16.msra.mxu0 0
    %764 = vmatprep.subr.bf16.mxu0 0
    %765 = vmatpush2.bf16.msra.mxu0 0
    %766 = vmatprep.subr.bf16.mxu0 0
    %767 = vmatpush2.bf16.msra.mxu0 0
    %768 = vmatprep.subr.bf16.mxu0 0
    %769 = vmatpush2.bf16.msra.mxu0 0
    %770 = vmatprep.subr.bf16.mxu0 0
    %771 = vmatpush2.bf16.msra.mxu0 0
    %772 = vmatprep.subr.bf16.mxu0 0
    %773 = vmatpush2.bf16.msra.mxu0 0
    %774 = vmatprep.subr.bf16.mxu0 0
    %775 = vmatpush2.bf16.msra.mxu0 0
    %776 = vmatprep.subr.bf16.mxu0 0
    %777 = vmatpush2.bf16.msra.mxu0 0
    %778 = vmatprep.mubr.bf16.mxu0 0
    %779 = vmatmul.mubr.bf16.gmra.mxu0 %v744
    %v780 = vpop.f32.mrf.mxu0
    %v781 = vadd.f32 0.0, %v780
    %v782 = vpop.f32.mrf.mxu0
    %v783 = vpop.f32.mrf.mxu0
    %v784 = vadd.f32 0.0, %v783
    %v785 = vpop.f32.mrf.mxu0
    %786 = vdwg.mxu0
    %v787 = vadd.f32 %v72, %v781
    %v788 = vadd.f32 %v73, %v784
    %v789 = vlaneseq
    %v790 = vshrl.u32 %v789, 7
    %v791 = vsub.s32 0, %v790
    %v792 = vrot.slane %v76, %v791
    %v793 = vadd.f32 %v787, %v792
    %v794 = vadd.f32 %v788, %v792
    %v795 = vsel %vm112, %v793, 0.0
    %796 = vadd.xlane.f32.xlu0 %v795
    %v797 = vpop.xlane.xlu0 %796
    %v798 = vsel %vm112, %v794, 0.0
    %799 = vadd.xlane.f32.xlu0 %v798
    %v800 = vpop.xlane.xlu0 %799
    %v801 = vmul.f32 %v797, %v119
    %v802 = vmul.f32 %v800, %v119
    %v803 = vsub.f32 %v793, %v801
    %v804 = vsub.f32 %v794, %v802
    %v805 = vmul.f32 %v803, %v803
    %v806 = vmul.f32 %v804, %v804
    %v807 = vsel %vm112, %v805, 0.0
    %808 = vadd.xlane.f32.xlu0 %v807
    %v809 = vpop.xlane.xlu0 %808
    %v810 = vsel %vm112, %v806, 0.0
    %811 = vadd.xlane.f32.xlu0 %v810
    %v812 = vpop.xlane.xlu0 %811
    %v813 = vmul.f32 %v809, %v119
    %v814 = vmul.f32 %v812, %v119
    %v815 = vadd.f32 %v813, 1e-05
    %v816 = vadd.f32 %v814, 1e-05
    %v817 = vrsqrt.pop %v815
    %v818 = vrsqrt.pop %v816
    %v819 = vmul.f32 %v803, %v817
    %v820 = vmul.f32 %v804, %v818
    %v821 = vlaneseq
    %v822 = vshrl.u32 %v821, 7
    %v823 = vsub.s32 0, %v822
    %v824 = vrot.slane %v77, %v823
    %v825 = vmul.f32 %v819, %v824
    %v826 = vmul.f32 %v820, %v824
    %v827 = vlaneseq
    %v828 = vshrl.u32 %v827, 7
    %v829 = vsub.s32 0, %v828
    %v830 = vrot.slane %v78, %v829
    %v831 = vadd.f32 %v825, %v830
    %v832 = vadd.f32 %v826, %v830
    %v833 = vpack.c.bf16 %v832, %v831
    %v834 = vlaneseq
    %v835 = vshrl.u32 %v834, 7
    %v836 = vsub.s32 0, %v835
    %v837 = vrot.slane %v81, %v836
    %v842 = vunpack.c.l.b16 %v90
    %v843 = vunpack.c.l.b16 %v91
    %v844 = vunpack.c.l.b16 %v92
    %v845 = vunpack.c.l.b16 %v93
    %v846 = vpack.c.b16 %v843, %v842
    %v847 = vpack.c.b16 %v845, %v844
    %v851 = vsel %vm112, %v833, 0
    %853 = vmatprep.subr.bf16.mxu0 0
    %854 = vmatpush1.bf16.msra.mxu0 0
    %855 = vmatprep.subr.bf16.mxu0 0
    %856 = vmatpush1.bf16.msra.mxu0 0
    %857 = vmatprep.subr.bf16.mxu0 0
    %858 = vmatpush1.bf16.msra.mxu0 0
    %859 = vmatprep.subr.bf16.mxu0 0
    %860 = vmatpush1.bf16.msra.mxu0 0
    %861 = vmatprep.subr.bf16.mxu0 0
    %862 = vmatpush1.bf16.msra.mxu0 0
    %863 = vmatprep.subr.bf16.mxu0 0
    %864 = vmatpush1.bf16.msra.mxu0 0
    %865 = vmatprep.subr.bf16.mxu0 0
    %866 = vmatpush1.bf16.msra.mxu0 %v847
    %867 = vmatprep.subr.bf16.mxu0 0
    %868 = vmatpush1.bf16.msra.mxu0 %v846
    %869 = vmatprep.subr.bf16.mxu0 0
    %870 = vmatpush2.bf16.msra.mxu0 0
    %871 = vmatprep.subr.bf16.mxu0 0
    %872 = vmatpush2.bf16.msra.mxu0 0
    %873 = vmatprep.subr.bf16.mxu0 0
    %874 = vmatpush2.bf16.msra.mxu0 0
    %875 = vmatprep.subr.bf16.mxu0 0
    %876 = vmatpush2.bf16.msra.mxu0 0
    %877 = vmatprep.subr.bf16.mxu0 0
    %878 = vmatpush2.bf16.msra.mxu0 0
    %879 = vmatprep.subr.bf16.mxu0 0
    %880 = vmatpush2.bf16.msra.mxu0 0
    %881 = vmatprep.subr.bf16.mxu0 0
    %882 = vmatpush2.bf16.msra.mxu0 0
    %883 = vmatprep.subr.bf16.mxu0 0
    %884 = vmatpush2.bf16.msra.mxu0 0
    %885 = vmatprep.mubr.bf16.mxu0 0
    %886 = vmatmul.mubr.bf16.gmra.mxu0 %v851
    %v887 = vpop.f32.mrf.mxu0
    %v888 = vadd.f32 %v837, %v887
    %v889 = vpop.f32.mrf.mxu0
    %v890 = vpop.f32.mrf.mxu0
    %v891 = vadd.f32 %v837, %v890
    %v892 = vpop.f32.mrf.mxu0
    %893 = vdwg.mxu0
    %v894 = vmul.f32 %v888, 0.5
    %v895 = vmul.f32 %v891, 0.5
    %v896 = vmul.f32 %v888, 0.044715
    %v897 = vmul.f32 %v891, 0.044715
    %v898 = vmul.f32 %v896, %v888
    %v899 = vmul.f32 %v897, %v891
    %v900 = vmul.f32 %v898, %v888
    %v901 = vmul.f32 %v899, %v891
    %v902 = vadd.f32 %v888, %v900
    %v903 = vadd.f32 %v891, %v901
    %v904 = vmul.f32 %v902, 0.7978846
    %v905 = vmul.f32 %v903, 0.7978846
    %v906 = vtanh.pop %v904
    %v907 = vtanh.pop %v905
    %v908 = vadd.f32 %v906, 1.0
    %v909 = vadd.f32 %v907, 1.0
    %v910 = vmul.f32 %v894, %v908
    %v911 = vmul.f32 %v895, %v909
    %v912 = vpack.c.bf16 %v911, %v910
    %v929 = vunpack.c.l.b16 %v94
    %v930 = vunpack.c.l.b16 %v95
    %v931 = vunpack.c.l.b16 %v96
    %v932 = vunpack.c.l.b16 %v97
    %v933 = vunpack.c.l.b16 %v98
    %v934 = vunpack.c.l.b16 %v99
    %v935 = vunpack.c.l.b16 %v100
    %v936 = vunpack.c.l.b16 %v101
    %v937 = vunpack.c.l.b16 %v102
    %v938 = vunpack.c.l.b16 %v103
    %v939 = vunpack.c.l.b16 %v104
    %v940 = vunpack.c.l.b16 %v105
    %v941 = vunpack.c.l.b16 %v106
    %v942 = vunpack.c.l.b16 %v107
    %v943 = vunpack.c.l.b16 %v108
    %v944 = vunpack.c.l.b16 %v109
    %v945 = vpack.c.b16 %v930, %v929
    %v946 = vpack.c.b16 %v932, %v931
    %v947 = vpack.c.b16 %v934, %v933
    %v948 = vpack.c.b16 %v936, %v935
    %v949 = vpack.c.b16 %v938, %v937
    %v950 = vpack.c.b16 %v940, %v939
    %v951 = vpack.c.b16 %v942, %v941
    %v952 = vpack.c.b16 %v944, %v943
    %961 = vmatprep.subr.bf16.mxu0 0
    %962 = vmatpush1.bf16.msra.mxu0 %v952
    %963 = vmatprep.subr.bf16.mxu0 0
    %964 = vmatpush1.bf16.msra.mxu0 %v951
    %965 = vmatprep.subr.bf16.mxu0 0
    %966 = vmatpush1.bf16.msra.mxu0 %v950
    %967 = vmatprep.subr.bf16.mxu0 0
    %968 = vmatpush1.bf16.msra.mxu0 %v949
    %969 = vmatprep.subr.bf16.mxu0 0
    %970 = vmatpush1.bf16.msra.mxu0 %v948
    %971 = vmatprep.subr.bf16.mxu0 0
    %972 = vmatpush1.bf16.msra.mxu0 %v947
    %973 = vmatprep.subr.bf16.mxu0 0
    %974 = vmatpush1.bf16.msra.mxu0 %v946
    %975 = vmatprep.subr.bf16.mxu0 0
    %976 = vmatpush1.bf16.msra.mxu0 %v945
    %977 = vmatprep.subr.bf16.mxu0 0
    %978 = vmatpush2.bf16.msra.mxu0 0
    %979 = vmatprep.subr.bf16.mxu0 0
    %980 = vmatpush2.bf16.msra.mxu0 0
    %981 = vmatprep.subr.bf16.mxu0 0
    %982 = vmatpush2.bf16.msra.mxu0 0
    %983 = vmatprep.subr.bf16.mxu0 0
    %984 = vmatpush2.bf16.msra.mxu0 0
    %985 = vmatprep.subr.bf16.mxu0 0
    %986 = vmatpush2.bf16.msra.mxu0 0
    %987 = vmatprep.subr.bf16.mxu0 0
    %988 = vmatpush2.bf16.msra.mxu0 0
    %989 = vmatprep.subr.bf16.mxu0 0
    %990 = vmatpush2.bf16.msra.mxu0 0
    %991 = vmatprep.subr.bf16.mxu0 0
    %992 = vmatpush2.bf16.msra.mxu0 0
    %993 = vmatprep.mubr.bf16.mxu0 0
    %994 = vmatmul.mubr.bf16.gmra.mxu0 %v912
    %v995 = vpop.f32.mrf.mxu0
    %v996 = vadd.f32 0.0, %v995
    %v997 = vpop.f32.mrf.mxu0
    %v998 = vpop.f32.mrf.mxu0
    %v999 = vadd.f32 0.0, %v998
    %v1000 = vpop.f32.mrf.mxu0
    %1001 = vdwg.mxu0
    %v1002 = vadd.f32 %v793, %v996
    %v1003 = vadd.f32 %v794, %v999
    %v1004 = vlaneseq
    %v1005 = vshrl.u32 %v1004, 7
    %v1006 = vsub.s32 0, %v1005
    %v1007 = vrot.slane %v79, %v1006
    %v1008 = vadd.f32 %v1002, %v1007
    %v1009 = vadd.f32 %v1003, %v1007
    %1010 = vst.msk [vmem:[#allocation10] sm:$0xff] %vm112, %v1008
    %1011 = vst.msk [vmem:[#allocation10 + $0x8] sm:$0xff] %vm112, %v1009
    // Predicated region
    $region34: #{tpu_custom_call.1} parent=1 // pred_check
      _
    $region35: #{tpu_custom_call.1} parent=1 // pred_check_branch
      %1013 = sbr.rel (0) target = $region37
    $region36: #{tpu_custom_call.1} parent=1 // pred_region
      %s1015 = ssub.s32 256, 256
      %1016 = vsyncadd [#allocation4], %s1015
      %s1017 = sshll.u32 [#allocation10], 4
      %s1018 = int_to_ptr.vmem [resolvable:$true] %s1017
      %1023 = dma.vmem_to_hbm [thread:$0]  %s1018, 256, %s4, [#allocation4], 128, 128, 8
    $region37: #{tpu_custom_call.1} parent=1 // pred_fallthru
      _
    // Predicated region
    $region38: #{tpu_custom_call.1} parent=1 // pred_check
      _
    $region39: #{tpu_custom_call.1} parent=1 // pred_check_branch
      %1025 = sbr.rel (0) target = $region41
    $region40: #{tpu_custom_call.1} parent=1 // pred_region
      %1026 = dma.done [#allocation4], 256
    $region41: #{tpu_custom_call.1} parent=1 // pred_fallthru
      _
    %1027 = vsyncpa [#allocation3], 1
    %1028 = vsyncpa [#allocation6], 1
    %1029 = vsyncpa [#allocation9], 1
    %1030 = vsyncpa [#allocation4], 1

</llo_original>
